<compile_context>
chip_gen: v7x
topology: tpu7x:2x2x1
jax: 0.10.0
libtpu: 0.0.40
codegen_flags: <defaults>
</compile_context>

<pallas_src>
import math
import numpy as np
import jax
import jax.numpy as jnp
from jax.experimental import pallas as pl
from jax.experimental.pallas import tpu as pltpu

# ----------------------------- configuration --------------------------------
LEVELS = 3
FAMILIES = ("db4", "sym4", "dmey")
NUM_FAM = len(FAMILIES)
HIDDEN = 128          # selector hidden width (nn.Linear(embed_dim, 128))
FILT_LEN = 8

_GELU_C = math.sqrt(2.0 / math.pi)


def _gelu_tanh(x):
    return 0.5 * x * (1.0 + jnp.tanh(_GELU_C * (x + 0.044715 * x * x * x)))


# --------------- wavelet filter taps (compile-time constants) ----------------
_DB4_LO = np.array([-0.010597401784997278, 0.032883011666982945,
                    0.030841381835986965, -0.18703481171888114,
                    -0.02798376941698385, 0.6308807679295904,
                    0.7148465705525415, 0.23037781330885523], np.float32)
_SYM4_LO = np.array([-0.07576571478927333, -0.02963552764599851,
                     0.49761866763201545, 0.8037387518059161,
                     0.29785779560527736, -0.09921954357684722,
                     -0.012603967262037833, 0.0322231006040427], np.float32)
_rng = np.random.default_rng(0)
_DMEY_LO = _rng.standard_normal(FILT_LEN).astype(np.float32)
_DMEY_LO = (_DMEY_LO / np.linalg.norm(_DMEY_LO)).astype(np.float32)


def _qmf_hi(lo):
    n = np.arange(lo.shape[0])
    return (((-1.0) ** (n + 1)) * lo[::-1]).astype(np.float32)


FAM_LO = (_DB4_LO, _SYM4_LO, _DMEY_LO)
FAM_HI = tuple(_qmf_hi(lo) for lo in FAM_LO)


def _periodic_head(a, s_l):
    """First FILT_LEN rows of the periodic extension of `a` (period s_l)."""
    if s_l >= FILT_LEN:
        return a[:FILT_LEN]
    reps = -(-FILT_LEN // s_l)
    return jnp.concatenate([a] * reps, axis=0)[:FILT_LEN]


# ------------------------------ Pallas kernels --------------------------------
def _selector_kernel(x_ref, w1_ref, b1_ref, w2_ref, b2_ref, sel_ref):
    """Per-batch selector MLP + softmax.  Grid: (B,)."""
    x_blk = x_ref[0]                                       # [S, D]
    ctx = jnp.mean(x_blk, axis=0, keepdims=True)           # [1, D]
    h = jnp.dot(ctx, w1_ref[...],
                preferred_element_type=jnp.float32) + b1_ref[...]
    h = _gelu_tanh(h)
    logits = jnp.dot(h, w2_ref[...],
                     preferred_element_type=jnp.float32) + b2_ref[...]
    logits = logits - jnp.max(logits, axis=-1, keepdims=True)
    e = jnp.exp(logits)
    # exact reciprocal: one scalar per sample, not on any hot path
    sel = e * pl.reciprocal(jnp.sum(e, axis=-1, keepdims=True), approx=False)
    sel_ref[0] = sel                                       # [1, F]


def _dwt_combine_kernel(sel_ref, x_ref, approx_ref, d0_ref, d1_ref, d2_ref,
                        buf_ref):
    """Per (batch, embed-tile): 3-level, 3-family banded DWT + weighted combine.

    Each level: y[t] = sum_k f[k] * a[(2t+k) mod S_l], realised as 8 stride-2
    VMEM reads from a periodically-extended scratch buffer and constant FMAs.
    Level 0 (the largest) is shared across families.
    Grid: (B, D // TD).
    """
    S = x_ref.shape[1]
    TD = x_ref.shape[2]
    sel_row = sel_ref[0]                                   # [1, F]
    w = [sel_row[0:1, f:f + 1] for f in range(NUM_FAM)]    # runtime [1,1] weights
    d_refs = (d0_ref, d1_ref, d2_ref)

    x_blk = x_ref[0]                                       # [S, TD]

    # ---- level 0: staging buffer + windows shared by all families ----
    s_h0 = S // 2
    buf_ref[0:S, :] = x_blk
    buf_ref[S:S + FILT_LEN, :] = _periodic_head(x_blk, S)

    app0 = [jnp.zeros((s_h0, TD), jnp.float32) for _ in range(NUM_FAM)]
    det0 = jnp.zeros((s_h0, TD), jnp.float32)
    for k in range(FILT_LEN):
        # rows 2t + k, t = 0..s_h0-1  (stride-2 sublane read)
        win = buf_ref[pl.ds(k, s_h0, stride=2), :]
        # combined high-pass tap: sum_f w_f * hi_f[k]  (identical to combining
        # the per-family level-0 details after filtering)
        ctap = w[0] * float(FAM_HI[0][k])
        for f in range(1, NUM_FAM):
            ctap = ctap + w[f] * float(FAM_HI[f][k])
        det0 = det0 + ctap * win
        for f in range(NUM_FAM):
            app0[f] = app0[f] + float(FAM_LO[f][k]) * win
    d_refs[0][0] = det0                                    # combined detail, level 1

    # ---- levels 1..L-1: per family (approximation path diverges) ----
    acc_app = jnp.zeros((S >> LEVELS, TD), jnp.float32)
    acc_det = [jnp.zeros((S >> (l + 1), TD), jnp.float32)
               for l in range(1, LEVELS)]

    for f in range(NUM_FAM):
        lo_taps, hi_taps = FAM_LO[f], FAM_HI[f]
        a = app0[f]                                        # current approximation
        for l in range(1, LEVELS):
            s_l = S >> l
            s_h = s_l // 2
            buf_ref[0:s_l, :] = a
            buf_ref[s_l:s_l + FILT_LEN, :] = _periodic_head(a, s_l)

            app = jnp.zeros((s_h, TD), jnp.float32)
            det = jnp.zeros((s_h, TD), jnp.float32)
            for k in range(FILT_LEN):
                win = buf_ref[pl.ds(k, s_h, stride=2), :]
                app = app + float(lo_taps[k]) * win
                det = det + float(hi_taps[k]) * win
            acc_det[l - 1] = acc_det[l - 1] + w[f] * det
            a = app
        acc_app = acc_app + w[f] * a

    approx_ref[0] = acc_app
    for l in range(1, LEVELS):
        d_refs[l][0] = acc_det[l - 1]


# ------------------------------ wrapper ----------------------------------------
def adaptive_basis_selection(x, params, *, d_tile=128):
    """Pallas forward. Returns (combined_approx, [detail_l1, detail_l2, detail_l3])."""
    B, S, D = x.shape
    assert S % (1 << LEVELS) == 0, "seq_length must be divisible by 2**levels"
    TD = d_tile if D % d_tile == 0 else D
    nd = D // TD

    # ---- kernel 1: selector weights [B, 1, F] ----
    sel = pl.pallas_call(
        _selector_kernel,
        grid=(B,),
        in_specs=[pl.BlockSpec((1, S, D), lambda b: (b, 0, 0)),
                  pl.BlockSpec((D, HIDDEN), lambda b: (0, 0)),
                  pl.BlockSpec((1, HIDDEN), lambda b: (0, 0)),
                  pl.BlockSpec((HIDDEN, NUM_FAM), lambda b: (0, 0)),
                  pl.BlockSpec((1, NUM_FAM), lambda b: (0, 0))],
        out_specs=pl.BlockSpec((1, 1, NUM_FAM), lambda b: (b, 0, 0)),
        out_shape=jax.ShapeDtypeStruct((B, 1, NUM_FAM), jnp.float32),
        compiler_params=pltpu.CompilerParams(
            dimension_semantics=("parallel",),
            vmem_limit_bytes=32 * 1024 * 1024),
    )(x, params["w1"], params["b1"], params["w2"], params["b2"])

    # ---- kernel 2: banded DWT + weighted combine ----
    out_shape = (
        jax.ShapeDtypeStruct((B, S // 8, D), jnp.float32),   # combined approx
        jax.ShapeDtypeStruct((B, S // 2, D), jnp.float32),   # detail level 1
        jax.ShapeDtypeStruct((B, S // 4, D), jnp.float32),   # detail level 2
        jax.ShapeDtypeStruct((B, S // 8, D), jnp.float32),   # detail level 3
    )
    approx, d0, d1, d2 = pl.pallas_call(
        _dwt_combine_kernel,
        grid=(B, nd),
        in_specs=[pl.BlockSpec((1, 1, NUM_FAM), lambda b, d: (b, 0, 0)),
                  pl.BlockSpec((1, S, TD), lambda b, d: (b, 0, d))],
        out_specs=(pl.BlockSpec((1, S // 8, TD), lambda b, d: (b, 0, d)),
                   pl.BlockSpec((1, S // 2, TD), lambda b, d: (b, 0, d)),
                   pl.BlockSpec((1, S // 4, TD), lambda b, d: (b, 0, d)),
                   pl.BlockSpec((1, S // 8, TD), lambda b, d: (b, 0, d))),
        out_shape=out_shape,
        scratch_shapes=[pltpu.VMEM((S + FILT_LEN, TD), jnp.float32)],
        compiler_params=pltpu.CompilerParams(
            dimension_semantics=("parallel", "parallel"),
            vmem_limit_bytes=32 * 1024 * 1024),
    )(sel, x)
    return approx, [d0, d1, d2]


# ------------------------------ parameters --------------------------------------
def build_params(embed_dim, key):
    """Deterministic synthetic selector-MLP parameters (no checkpoint)."""
    k1, k2, k3, k4 = jax.random.split(key, 4)
    w1 = jax.random.normal(k1, (embed_dim, HIDDEN), jnp.float32) / math.sqrt(embed_dim)
    b1 = 0.01 * jax.random.normal(k2, (1, HIDDEN), jnp.float32)
    w2 = jax.random.normal(k3, (HIDDEN, NUM_FAM), jnp.float32) / math.sqrt(HIDDEN)
    b2 = 0.01 * jax.random.normal(k4, (1, NUM_FAM), jnp.float32)
    return dict(w1=w1, b1=b1, w2=w2, b2=b2)


# ------------------------------ pure-JAX reference -------------------------------
def _dwt_step_ref(a, taps):
    s_l = a.shape[1]
    idx = (2 * np.arange(s_l // 2)[:, None] + np.arange(FILT_LEN)[None, :]) % s_l
    g = a[:, idx, :]                                        # [B, S_h, K, D]
    t = jnp.asarray(taps, jnp.float32)[None, None, :, None]
    return jnp.sum(g * t, axis=2)


def reference(x, params):
    hp = jax.lax.Precision.HIGHEST
    context = x.mean(axis=1)
    h = _gelu_tanh(jnp.dot(context, params["w1"], precision=hp) + params["b1"])
    sel = jax.nn.softmax(jnp.dot(h, params["w2"], precision=hp) + params["b2"], axis=-1)
    all_approx, all_details = [], []
    for f in range(NUM_FAM):
        a = x
        dets = []
        for _ in range(LEVELS):
            dets.append(_dwt_step_ref(a, FAM_HI[f]))
            a = _dwt_step_ref(a, FAM_LO[f])
        all_approx.append(a)
        all_details.append(dets)
    w = sel[:, None, None, :]                               # [B,1,1,F]
    comb_a = jnp.sum(jnp.stack(all_approx, axis=-1) * w, axis=-1)
    comb_d = []
    for l in range(LEVELS):
        sd = jnp.stack([all_details[f][l] for f in range(NUM_FAM)], axis=-1)
        comb_d.append(jnp.sum(sd * w, axis=-1))
    return comb_a, comb_d


# ----------------------------------- main ----------------------------------------
if __name__ == "__main__":
    B, S, D = 2, 32, 128
    key = jax.random.PRNGKey(0)
    kx, kp = jax.random.split(key)
    x = jax.random.normal(kx, (B, S, D), jnp.float32)
    params = build_params(D, kp)

    approx, details = adaptive_basis_selection(x, params)
    jax.block_until_ready(approx)
    for d in details:
        jax.block_until_ready(d)

    ref_a, ref_d = reference(x, params)
    np.testing.assert_allclose(np.asarray(approx), np.asarray(ref_a),
                               rtol=1e-3, atol=1e-5)
    for got, want in zip(details, ref_d):
        np.testing.assert_allclose(np.asarray(got), np.asarray(want),
                                   rtol=1e-3, atol=1e-5)

    print("KERNEL_OK")
</pallas_src>

<mosaic_0001>
module attributes {stable_mosaic.version = 11 : i64} {
  func.func @_selector_kernel(%arg0: i32, %arg1: memref<1x32x128xf32, #tpu.memory_space<vmem>>, %arg2: memref<128x128xf32, #tpu.memory_space<vmem>>, %arg3: memref<1x128xf32, #tpu.memory_space<vmem>>, %arg4: memref<128x3xf32, #tpu.memory_space<vmem>>, %arg5: memref<1x3xf32, #tpu.memory_space<vmem>>, %arg6: memref<1x1x3xf32, #tpu.memory_space<vmem>>) attributes {dimension_semantics = [#tpu.dimension_semantics<parallel>], iteration_bounds = array<i64: 2>, scalar_prefetch = 0 : i64, scratch_operands = 0 : i64, tpu.core_type = #tpu.core_type<tc>, window_params = [{transform_indices = @transform_0, window_bounds = array<i64: 1, 32, 128>}, {pipeline_mode = #tpu.pipeline_mode<synchronous>, transform_indices = @transform_1, window_bounds = array<i64: 128, 128>}, {pipeline_mode = #tpu.pipeline_mode<synchronous>, transform_indices = @transform_2, window_bounds = array<i64: 1, 128>}, {pipeline_mode = #tpu.pipeline_mode<synchronous>, transform_indices = @transform_3, window_bounds = array<i64: 128, 3>}, {pipeline_mode = #tpu.pipeline_mode<synchronous>, transform_indices = @transform_4, window_bounds = array<i64: 1, 3>}, {transform_indices = @transform_5, window_bounds = array<i64: 1, 1, 3>}]} {
    %c0 = arith.constant 0 : index
    %c0_0 = arith.constant 0 : index
    %c0_1 = arith.constant 0 : index
    %0 = vector.load %arg1[%c0, %c0_0, %c0_1] : memref<1x32x128xf32, #tpu.memory_space<vmem>>, vector<1x32x128xf32>
    %1 = vector.shape_cast %0 : vector<1x32x128xf32> to vector<32x128xf32>
    %cst = arith.constant dense<0.000000e+00> : vector<128xf32>
    %2 = vector.multi_reduction <add>, %1, %cst [0] : vector<32x128xf32> to vector<128xf32>
    %3 = vector.shape_cast %2 : vector<128xf32> to vector<1x128xf32>
    %cst_2 = arith.constant 3.200000e+01 : f32
    %4 = vector.broadcast %cst_2 : f32 to vector<1x128xf32>
    %5 = arith.divf %3, %4 : vector<1x128xf32>
    %c0_3 = arith.constant 0 : index
    %c0_4 = arith.constant 0 : index
    %6 = vector.load %arg2[%c0_3, %c0_4] : memref<128x128xf32, #tpu.memory_space<vmem>>, vector<128x128xf32>
    %cst_5 = arith.constant dense<0.000000e+00> : vector<1x128xf32>
    %7 = tpu.matmul %5, %6, %cst_5 {dimension_numbers = #tpu.dot_dimension_numbers<[1], [0], [0], [1], [0, 0, 1, 1], [], []>} : vector<1x128xf32>, vector<128x128xf32>, vector<1x128xf32> -> vector<1x128xf32>
    %c0_6 = arith.constant 0 : index
    %c0_7 = arith.constant 0 : index
    %8 = vector.load %arg3[%c0_6, %c0_7] : memref<1x128xf32, #tpu.memory_space<vmem>>, vector<1x128xf32>
    %9 = arith.addf %7, %8 : vector<1x128xf32>
    %cst_8 = arith.constant 5.000000e-01 : f32
    %10 = vector.broadcast %cst_8 : f32 to vector<1x128xf32>
    %11 = arith.mulf %10, %9 : vector<1x128xf32>
    %cst_9 = arith.constant 4.471500e-02 : f32
    %12 = vector.broadcast %cst_9 : f32 to vector<1x128xf32>
    %13 = arith.mulf %12, %9 : vector<1x128xf32>
    %14 = arith.mulf %13, %9 : vector<1x128xf32>
    %15 = arith.mulf %14, %9 : vector<1x128xf32>
    %16 = arith.addf %9, %15 : vector<1x128xf32>
    %cst_10 = arith.constant 0.797884583 : f32
    %17 = vector.broadcast %cst_10 : f32 to vector<1x128xf32>
    %18 = arith.mulf %17, %16 : vector<1x128xf32>
    %19 = math.tanh %18 : vector<1x128xf32>
    %cst_11 = arith.constant 1.000000e+00 : f32
    %20 = vector.broadcast %cst_11 : f32 to vector<1x128xf32>
    %21 = arith.addf %20, %19 : vector<1x128xf32>
    %22 = arith.mulf %11, %21 : vector<1x128xf32>
    %c0_12 = arith.constant 0 : index
    %c0_13 = arith.constant 0 : index
    %23 = vector.load %arg4[%c0_12, %c0_13] : memref<128x3xf32, #tpu.memory_space<vmem>>, vector<128x3xf32>
    %cst_14 = arith.constant dense<0.000000e+00> : vector<1x3xf32>
    %24 = tpu.matmul %22, %23, %cst_14 {dimension_numbers = #tpu.dot_dimension_numbers<[1], [0], [0], [1], [0, 0, 1, 1], [], []>} : vector<1x128xf32>, vector<128x3xf32>, vector<1x3xf32> -> vector<1x3xf32>
    %c0_15 = arith.constant 0 : index
    %c0_16 = arith.constant 0 : index
    %25 = vector.load %arg5[%c0_15, %c0_16] : memref<1x3xf32, #tpu.memory_space<vmem>>, vector<1x3xf32>
    %26 = arith.addf %24, %25 : vector<1x3xf32>
    %cst_17 = arith.constant dense<0xFF800000> : vector<1xf32>
    %27 = vector.multi_reduction <maximumf>, %26, %cst_17 [1] : vector<1x3xf32> to vector<1xf32>
    %28 = vector.shape_cast %27 : vector<1xf32> to vector<1x1xf32>
    %29 = vector.broadcast %28 : vector<1x1xf32> to vector<1x3xf32>
    %30 = arith.subf %26, %29 : vector<1x3xf32>
    %31 = math.exp %30 : vector<1x3xf32>
    %cst_18 = arith.constant dense<0.000000e+00> : vector<1xf32>
    %32 = vector.multi_reduction <add>, %31, %cst_18 [1] : vector<1x3xf32> to vector<1xf32>
    %33 = vector.shape_cast %32 : vector<1xf32> to vector<1x1xf32>
    %34 = tpu.reciprocal %33 : vector<1x1xf32> -> vector<1x1xf32>
    %35 = vector.broadcast %34 : vector<1x1xf32> to vector<1x3xf32>
    %36 = arith.mulf %31, %35 : vector<1x3xf32>
    %c0_19 = arith.constant 0 : index
    %c0_20 = arith.constant 0 : index
    %c0_21 = arith.constant 0 : index
    %37 = vector.load %arg6[%c0_19, %c0_20, %c0_21] : memref<1x1x3xf32, #tpu.memory_space<vmem>>, vector<1x1x3xf32>
    %38 = vector.shape_cast %37 : vector<1x1x3xf32> to vector<1x3xf32>
    %39 = vector.shape_cast %36 : vector<1x3xf32> to vector<1x1x3xf32>
    tpu.vector_store %arg6[%c0_19, %c0_20, %c0_21], %39 {strides = array<i32>} : memref<1x1x3xf32, #tpu.memory_space<vmem>>, vector<1x1x3xf32>,
    return
  }
  func.func @transform_0(%arg0: i32) -> (i32, i32, i32) {
    %c0_i32 = arith.constant 0 : i32
    %c0_i32_0 = arith.constant 0 : i32
    %c0_i32_1 = arith.constant 0 : i32
    return %arg0, %c0_i32, %c0_i32_0 : i32, i32, i32
  }
  func.func @transform_1(%arg0: i32) -> (i32, i32) {
    %c0_i32 = arith.constant 0 : i32
    %c0_i32_0 = arith.constant 0 : i32
    %c0_i32_1 = arith.constant 0 : i32
    return %c0_i32, %c0_i32_0 : i32, i32
  }
  func.func @transform_2(%arg0: i32) -> (i32, i32) {
    %c0_i32 = arith.constant 0 : i32
    %c0_i32_0 = arith.constant 0 : i32
    %c0_i32_1 = arith.constant 0 : i32
    return %c0_i32, %c0_i32_0 : i32, i32
  }
  func.func @transform_3(%arg0: i32) -> (i32, i32) {
    %c0_i32 = arith.constant 0 : i32
    %c0_i32_0 = arith.constant 0 : i32
    %c0_i32_1 = arith.constant 0 : i32
    return %c0_i32, %c0_i32_0 : i32, i32
  }
  func.func @transform_4(%arg0: i32) -> (i32, i32) {
    %c0_i32 = arith.constant 0 : i32
    %c0_i32_0 = arith.constant 0 : i32
    %c0_i32_1 = arith.constant 0 : i32
    return %c0_i32, %c0_i32_0 : i32, i32
  }
  func.func @transform_5(%arg0: i32) -> (i32, i32, i32) {
    %c0_i32 = arith.constant 0 : i32
    %c0_i32_0 = arith.constant 0 : i32
    %c0_i32_1 = arith.constant 0 : i32
    return %arg0, %c0_i32, %c0_i32_0 : i32, i32, i32
  }
}

</mosaic_0001>

<llo_original>
// kernel: tpu_custom_call.1
$region0: #{tpu_custom_call.1}
  #allocation0 [shape = 'u32[]', space=smem, size = 0x4, offset = 0x4, fixed_abs, tag = 'smem constant byte address 0x4 - core index']
  #allocation1 [shape = 'u32[144,128]{1,0:T(1,128)}', space=vmem, size = 0x12000, scoped, tag = 'internal scratch']
  %s0 = inlined_call_operand.hbm [shape: f32[2,32,128], index: 0, kind: input, shape index: {}]
  %s1 = inlined_call_operand.vmem [shape: f32[128,128], index: 1, kind: input, shape index: {}]
  %s2 = inlined_call_operand.vmem [shape: f32[1,128], index: 2, kind: input, shape index: {}]
  %s3 = inlined_call_operand.vmem [shape: f32[128,3], index: 3, kind: input, shape index: {}]
  %s4 = inlined_call_operand.vmem [shape: f32[1,3], index: 4, kind: input, shape index: {}]
  %s5 = inlined_call_operand.hbm [shape: f32[2,1,3], index: 5, kind: output, shape index: {}]
  %s6 = sld [smem:[#allocation0]]
  $region57: #{tpu_custom_call.1} parent=0
    _
  %s8 = ssub.s32 1, %s6
  %s9 = scalar_select 0, %s8, %s6
  $region1: #{tpu_custom_call.1} parent=0
    #allocation2 [shape = 'u8[32768]{0}', space=vmem, size = 0x8000, scoped, tag = 'input window, operand 0']
    #allocation3 [shape = 's32[2]{0}', space=sflag, size = 0x8, scoped, tag = 'scoped memory for tpu_custom_call.1']
    #allocation4 [shape = 's32[2]{0}', space=sflag, size = 0x8, scoped, tag = 'scoped memory for tpu_custom_call.1']
    #allocation5 [shape = 'u8[1024]{0}', space=vmem, size = 0x400, scoped, tag = 'output window, operand 0']
    %10 = vsyncpa [#allocation3], 0
    %s11 = scalar_lea.sflag [#allocation3], 1
    %12 = vsyncpa %s11, 0
    %13 = vsyncpa [#allocation4], 0
    %s14 = scalar_lea.sflag [#allocation4], 1
    %15 = vsyncpa %s14, 0
    loop: start=0, step=1, limit=4
    $region2: #{tpu_custom_call.1} parent=1 // loop_pre_header
      _
    $region3: #{tpu_custom_call.1} parent=1 // loop_header
      %s17 = sphi 0, %s21
      %p18 = scmp.ge.s32.totalorder %s17, 4
      %s27 = sphi 0, %s29
      %s30 = sphi 0, %s27
      %s31 = sphi 0, %s30
      %s47 = sphi 0, %s31
      %s51 = sphi 0, %s51
      %s53 = sphi 0, %s51
      %s54 = sphi 0, %s53
      %s68 = sphi 0, %s54
      %s72 = sphi 0, %s72
      %s74 = sphi 0, %s72
      %s75 = sphi 0, %s74
      %s89 = sphi 0, %s75
      %s93 = sphi 0, %s93
      %s95 = sphi 0, %s93
      %s96 = sphi 0, %s95
      %s110 = sphi 0, %s96
      %s114 = sphi 0, %s114
      %s116 = sphi 0, %s114
      %s117 = sphi 0, %s116
      %s131 = sphi 0, %s117
      %s137 = sphi 0, %s139
      %s140 = sphi 0, %s137
      %s141 = sphi 0, %s140
      %s157 = sphi 0, %s141
    $region4: #{tpu_custom_call.1} parent=1 // loop_header_branch
      %20 = sbr.rel (%p18) target = $region8
    $region5: #{tpu_custom_call.1} parent=1 // loop_body
      %s22 = ssub.s32 %s17, 1
      %s23 = ssub.s32 %s17, 2
      %s24 = sadd.s32 %s17, 1
      %s25 = ssub.s32 %s17, %s24
      %p26 = scmp.eq.s32.totalorder %s25, 0
      %s28 = sadd.s32 %s27, 1
      %s29 = scalar_select %p26, %s27, %s28
      %p32 = pneg %p26
      %p33 = scmp.eq.s32.totalorder %s17, 1
      %p34 = por %p32, %p33
      %p35 = scmp.ne.s32.totalorder %s27, %s30
      %p36 = scmp.eq.s32.totalorder %s17, 0
      %p37 = por %p35, %p36
      %p38 = scmp.ne.s32.totalorder %s27, %s30
      %p39 = scmp.eq.s32.totalorder %s22, 1
      %p40 = por %p38, %p39
      %p41 = scmp.ne.s32.totalorder %s30, %s31
      %p42 = scmp.eq.s32.totalorder %s22, 0
      %p43 = por %p41, %p42
      %p44 = scmp.ne.s32.totalorder %s30, %s31
      %p45 = scmp.eq.s32.totalorder %s23, 1
      %p46 = por %p44, %p45
      %p48 = scmp.ne.s32.totalorder %s31, %s47
      %p49 = scmp.eq.s32.totalorder %s23, 0
      %p50 = por %p48, %p49
      %s52 = sadd.s32 %s51, 1
      %p55 = scmp.eq.s32.totalorder %s17, 1
      %p56 = scmp.ne.s32.totalorder %s51, %s53
      %p57 = scmp.eq.s32.totalorder %s17, 0
      %p58 = por %p56, %p57
      %p59 = scmp.ne.s32.totalorder %s51, %s53
      %p60 = scmp.eq.s32.totalorder %s22, 1
      %p61 = por %p59, %p60
      %p62 = scmp.ne.s32.totalorder %s53, %s54
      %p63 = scmp.eq.s32.totalorder %s22, 0
      %p64 = por %p62, %p63
      %p65 = scmp.ne.s32.totalorder %s53, %s54
      %p66 = scmp.eq.s32.totalorder %s23, 1
      %p67 = por %p65, %p66
      %p69 = scmp.ne.s32.totalorder %s54, %s68
      %p70 = scmp.eq.s32.totalorder %s23, 0
      %p71 = por %p69, %p70
      %s73 = sadd.s32 %s72, 1
      %p76 = scmp.eq.s32.totalorder %s17, 1
      %p77 = scmp.ne.s32.totalorder %s72, %s74
      %p78 = scmp.eq.s32.totalorder %s17, 0
      %p79 = por %p77, %p78
      %p80 = scmp.ne.s32.totalorder %s72, %s74
      %p81 = scmp.eq.s32.totalorder %s22, 1
      %p82 = por %p80, %p81
      %p83 = scmp.ne.s32.totalorder %s74, %s75
      %p84 = scmp.eq.s32.totalorder %s22, 0
      %p85 = por %p83, %p84
      %p86 = scmp.ne.s32.totalorder %s74, %s75
      %p87 = scmp.eq.s32.totalorder %s23, 1
      %p88 = por %p86, %p87
      %p90 = scmp.ne.s32.totalorder %s75, %s89
      %p91 = scmp.eq.s32.totalorder %s23, 0
      %p92 = por %p90, %p91
      %s94 = sadd.s32 %s93, 1
      %p97 = scmp.eq.s32.totalorder %s17, 1
      %p98 = scmp.ne.s32.totalorder %s93, %s95
      %p99 = scmp.eq.s32.totalorder %s17, 0
      %p100 = por %p98, %p99
      %p101 = scmp.ne.s32.totalorder %s93, %s95
      %p102 = scmp.eq.s32.totalorder %s22, 1
      %p103 = por %p101, %p102
      %p104 = scmp.ne.s32.totalorder %s95, %s96
      %p105 = scmp.eq.s32.totalorder %s22, 0
      %p106 = por %p104, %p105
      %p107 = scmp.ne.s32.totalorder %s95, %s96
      %p108 = scmp.eq.s32.totalorder %s23, 1
      %p109 = por %p107, %p108
      %p111 = scmp.ne.s32.totalorder %s96, %s110
      %p112 = scmp.eq.s32.totalorder %s23, 0
      %p113 = por %p111, %p112
      %s115 = sadd.s32 %s114, 1
      %p118 = scmp.eq.s32.totalorder %s17, 1
      %p119 = scmp.ne.s32.totalorder %s114, %s116
      %p120 = scmp.eq.s32.totalorder %s17, 0
      %p121 = por %p119, %p120
      %p122 = scmp.ne.s32.totalorder %s114, %s116
      %p123 = scmp.eq.s32.totalorder %s22, 1
      %p124 = por %p122, %p123
      %p125 = scmp.ne.s32.totalorder %s116, %s117
      %p126 = scmp.eq.s32.totalorder %s22, 0
      %p127 = por %p125, %p126
      %p128 = scmp.ne.s32.totalorder %s116, %s117
      %p129 = scmp.eq.s32.totalorder %s23, 1
      %p130 = por %p128, %p129
      %p132 = scmp.ne.s32.totalorder %s117, %s131
      %p133 = scmp.eq.s32.totalorder %s23, 0
      %p134 = por %p132, %p133
      %s135 = ssub.s32 %s17, %s24
      %p136 = scmp.eq.s32.totalorder %s135, 0
      %s138 = sadd.s32 %s137, 1
      %s139 = scalar_select %p136, %s137, %s138
      %p142 = pneg %p136
      %p143 = scmp.eq.s32.totalorder %s17, 1
      %p144 = por %p142, %p143
      %p145 = scmp.ne.s32.totalorder %s137, %s140
      %p146 = scmp.eq.s32.totalorder %s17, 0
      %p147 = por %p145, %p146
      %p148 = scmp.ne.s32.totalorder %s137, %s140
      %p149 = scmp.eq.s32.totalorder %s22, 1
      %p150 = por %p148, %p149
      %p151 = scmp.ne.s32.totalorder %s140, %s141
      %p152 = scmp.eq.s32.totalorder %s22, 0
      %p153 = por %p151, %p152
      %p154 = scmp.ne.s32.totalorder %s140, %s141
      %p155 = scmp.eq.s32.totalorder %s23, 1
      %p156 = por %p154, %p155
      %p158 = scmp.ne.s32.totalorder %s141, %s157
      %p159 = scmp.eq.s32.totalorder %s23, 0
      %p160 = por %p158, %p159
      %p161 = scmp.le.s32.totalorder 1, %s17
      %p162 = scmp.lt.s32.totalorder %s17, 3
      %p163 = pnand %p161, %p162
      %p164 = pneg %p163
      // Predicated region
      $region9: #{tpu_custom_call.1} parent=5 // pred_check
        _
      $region10: #{tpu_custom_call.1} parent=5 // pred_check_branch
        %166 = sbr.rel (%p163) target = $region12
      $region11: #{tpu_custom_call.1} parent=5 // pred_region
        %s167 = ssub.s32 %s17, 1
        // Predicated region
        $region13: #{tpu_custom_call.1} parent=11 // pred_check
          %p168 = pneg %p64
        $region14: #{tpu_custom_call.1} parent=11 // pred_check_branch
          %170 = sbr.rel (%p168) target = $region16
        $region15: #{tpu_custom_call.1} parent=11 // pred_region
          _
        $region16: #{tpu_custom_call.1} parent=11 // pred_fallthru
          _
        // Predicated region
        $region17: #{tpu_custom_call.1} parent=11 // pred_check
          %p171 = pneg %p85
        $region18: #{tpu_custom_call.1} parent=11 // pred_check_branch
          %173 = sbr.rel (%p171) target = $region20
        $region19: #{tpu_custom_call.1} parent=11 // pred_region
          _
        $region20: #{tpu_custom_call.1} parent=11 // pred_fallthru
          _
        // Predicated region
        $region21: #{tpu_custom_call.1} parent=11 // pred_check
          %p174 = pneg %p106
        $region22: #{tpu_custom_call.1} parent=11 // pred_check_branch
          %176 = sbr.rel (%p174) target = $region24
        $region23: #{tpu_custom_call.1} parent=11 // pred_region
          _
        $region24: #{tpu_custom_call.1} parent=11 // pred_fallthru
          _
        // Predicated region
        $region25: #{tpu_custom_call.1} parent=11 // pred_check
          %p177 = pneg %p127
        $region26: #{tpu_custom_call.1} parent=11 // pred_check_branch
          %179 = sbr.rel (%p177) target = $region28
        $region27: #{tpu_custom_call.1} parent=11 // pred_region
          _
        $region28: #{tpu_custom_call.1} parent=11 // pred_fallthru
          _
      $region12: #{tpu_custom_call.1} parent=5 // pred_fallthru
        _
      %p180 = scmp.lt.s32.totalorder %s17, 2
      // Predicated region
      $region29: #{tpu_custom_call.1} parent=5 // pred_check
        %p181 = pneg %p180
      $region30: #{tpu_custom_call.1} parent=5 // pred_check_branch
        %183 = sbr.rel (%p181) target = $region32
      $region31: #{tpu_custom_call.1} parent=5 // pred_region
        // Predicated region
        $region33: #{tpu_custom_call.1} parent=31 // pred_check
          %p184 = pneg %p37
        $region34: #{tpu_custom_call.1} parent=31 // pred_check_branch
          %186 = sbr.rel (%p184) target = $region36
        $region35: #{tpu_custom_call.1} parent=31 // pred_region
          %s187 = sand.u32 %s27, 1
          %s188 = scalar_lea.sflag [#allocation3], %s187
          %s189 = sand.u32 %s27, 1
          %s190 = smul.addr %s189, 32
          %s191 = scalar_lea.vmem [#allocation2], %s190
          %s193 = ssub.s32 512, 512
          %194 = vsyncadd %s188, %s193
          %s195 = smul.addr %s17, 4
          %s196 = smul.addr %s195, 128
          %s197 = scalar_lea.hbm %s0, %s196
          %s198 = sshll.u32 %s191, 4
          %s199 = int_to_ptr.vmem [resolvable:$true] %s198
          %204 = dma.hbm_to_vmem [thread:$0]  %s197, 512, %s199, %s188, 128, 128, 8
        $region36: #{tpu_custom_call.1} parent=31 // pred_fallthru
          _
      $region32: #{tpu_custom_call.1} parent=5 // pred_fallthru
        _
      %p205 = scmp.le.s32.totalorder 1, %s17
      %p206 = scmp.lt.s32.totalorder %s17, 3
      %p207 = pnand %p205, %p206
      %p208 = pneg %p207
      // Predicated region
      $region37: #{tpu_custom_call.1} parent=5 // pred_check
        _
      $region38: #{tpu_custom_call.1} parent=5 // pred_check_branch
        %210 = sbr.rel (%p207) target = $region40
      $region39: #{tpu_custom_call.1} parent=5 // pred_region
        %s211 = ssub.s32 %s17, 1
        %s212 = sand.u32 %s30, 1
        %s213 = scalar_lea.sflag [#allocation3], %s212
        %s214 = sand.u32 %s30, 1
        %s215 = smul.addr %s214, 32
        %s216 = scalar_lea.vmem [#allocation2], %s215
        // Predicated region
        $region41: #{tpu_custom_call.1} parent=39 // pred_check
          %p217 = pneg %p43
        $region42: #{tpu_custom_call.1} parent=39 // pred_check_branch
          %219 = sbr.rel (%p217) target = $region44
        $region43: #{tpu_custom_call.1} parent=39 // pred_region
          %220 = dma.done %s213, 512
        $region44: #{tpu_custom_call.1} parent=39 // pred_fallthru
          _
        %s221 = sand.u32 %s30, 1
        %s222 = scalar_lea.sflag [#allocation3], %s221
        %s223 = sand.u32 %s30, 1
        %s224 = smul.addr %s223, 32
        %s225 = scalar_lea.vmem [#allocation2], %s224
        %p226 = pneg %p43
        %p227 = pneg %p40
        %p228 = pneg %p64
        %p229 = pneg %p61
        %p230 = pneg %p85
        %p231 = pneg %p82
        %p232 = pneg %p106
        %p233 = pneg %p103
        %p234 = pneg %p127
        %p235 = pneg %p124
        %p236 = pneg %p153
        %p237 = pneg %p150
        %s238 = sand.u32 %s140, 1
        %s239 = scalar_lea.sflag [#allocation4], %s238
        %s240 = sand.u32 %s140, 1
        %s241 = scalar_lea.vmem [#allocation5], %s240
        %v242 = vld [vmem:[%s216] sm:$0xff]
        %v243 = vld [vmem:[%s216 + $0x8] sm:$0xff]
        %v244 = vld [vmem:[%s216 + $0x10] sm:$0xff]
        %v245 = vld [vmem:[%s216 + $0x18] sm:$0xff]
        %v246 = vadd.f32 %v242, %v243
        %v247 = vadd.f32 %v246, %v244
        %v248 = vadd.f32 %v247, %v245
        %v249 = vrot.slane %v248, 4
        %v250 = vadd.f32 %v248, %v249
        %v251 = vrot.slane %v250, 2
        %v252 = vadd.f32 %v250, %v251
        %v253 = vrot.slane %v252, 1
        %v254 = vadd.f32 %v252, %v253
        %v255 = vrcp.pop 32.0
        %v256 = vmul.f32 %v254, %v255
        %v257 = vld [vmem:[%s1] sm:$0xff]
        %v258 = vld [vmem:[%s1 + $0x8] sm:$0xff]
        %v259 = vld [vmem:[%s1 + $0x10] sm:$0xff]
        %v260 = vld [vmem:[%s1 + $0x18] sm:$0xff]
        %v261 = vld [vmem:[%s1 + $0x20] sm:$0xff]
        %v262 = vld [vmem:[%s1 + $0x28] sm:$0xff]
        %v263 = vld [vmem:[%s1 + $0x30] sm:$0xff]
        %v264 = vld [vmem:[%s1 + $0x38] sm:$0xff]
        %v265 = vld [vmem:[%s1 + $0x40] sm:$0xff]
        %v266 = vld [vmem:[%s1 + $0x48] sm:$0xff]
        %v267 = vld [vmem:[%s1 + $0x50] sm:$0xff]
        %v268 = vld [vmem:[%s1 + $0x58] sm:$0xff]
        %v269 = vld [vmem:[%s1 + $0x60] sm:$0xff]
        %v270 = vld [vmem:[%s1 + $0x68] sm:$0xff]
        %v271 = vld [vmem:[%s1 + $0x70] sm:$0xff]
        %v272 = vld [vmem:[%s1 + $0x78] sm:$0xff]
        %v273 = vld [vmem:[%s2] sm:$0x1]
        %274 = vmatprep.subr.mxu0 0.0
        %275 = vmatpush1.msra.mxu0 %v257
        %276 = vmatprep.subr.mxu0 0.0
        %277 = vmatpush1.msra.mxu0 %v258
        %278 = vmatprep.subr.mxu0 0.0
        %279 = vmatpush1.msra.mxu0 %v259
        %280 = vmatprep.subr.mxu0 0.0
        %281 = vmatpush1.msra.mxu0 %v260
        %282 = vmatprep.subr.mxu0 0.0
        %283 = vmatpush1.msra.mxu0 %v261
        %284 = vmatprep.subr.mxu0 0.0
        %285 = vmatpush1.msra.mxu0 %v262
        %286 = vmatprep.subr.mxu0 0.0
        %287 = vmatpush1.msra.mxu0 %v263
        %288 = vmatprep.subr.mxu0 0.0
        %289 = vmatpush1.msra.mxu0 %v264
        %290 = vmatprep.subr.mxu0 0.0
        %291 = vmatpush1.msra.mxu0 %v265
        %292 = vmatprep.subr.mxu0 0.0
        %293 = vmatpush1.msra.mxu0 %v266
        %294 = vmatprep.subr.mxu0 0.0
        %295 = vmatpush1.msra.mxu0 %v267
        %296 = vmatprep.subr.mxu0 0.0
        %297 = vmatpush1.msra.mxu0 %v268
        %298 = vmatprep.subr.mxu0 0.0
        %299 = vmatpush1.msra.mxu0 %v269
        %300 = vmatprep.subr.mxu0 0.0
        %301 = vmatpush1.msra.mxu0 %v270
        %302 = vmatprep.subr.mxu0 0.0
        %303 = vmatpush1.msra.mxu0 %v271
        %304 = vmatprep.subr.mxu0 0.0
        %305 = vmatpush1.msra.mxu0 %v272
        %306 = vmatprep.subr.mxu0 0.0
        %307 = vmatpush1.msra.mxu0 0.0
        %308 = vmatprep.subr.mxu0 0.0
        %309 = vmatpush1.msra.mxu0 0.0
        %310 = vmatprep.subr.mxu0 0.0
        %311 = vmatpush1.msra.mxu0 0.0
        %312 = vmatprep.subr.mxu0 0.0
        %313 = vmatpush1.msra.mxu0 0.0
        %314 = vmatprep.subr.mxu0 0.0
        %315 = vmatpush1.msra.mxu0 0.0
        %316 = vmatprep.subr.mxu0 0.0
        %317 = vmatpush1.msra.mxu0 0.0
        %318 = vmatprep.subr.mxu0 0.0
        %319 = vmatpush1.msra.mxu0 0.0
        %320 = vmatprep.subr.mxu0 0.0
        %321 = vmatpush1.msra.mxu0 0.0
        %322 = vmatprep.subr.mxu0 0.0
        %323 = vmatpush1.msra.mxu0 0.0
        %324 = vmatprep.subr.mxu0 0.0
        %325 = vmatpush1.msra.mxu0 0.0
        %326 = vmatprep.subr.mxu0 0.0
        %327 = vmatpush1.msra.mxu0 0.0
        %328 = vmatprep.subr.mxu0 0.0
        %329 = vmatpush1.msra.mxu0 0.0
        %330 = vmatprep.subr.mxu0 0.0
        %331 = vmatpush1.msra.mxu0 0.0
        %332 = vmatprep.subr.mxu0 0.0
        %333 = vmatpush1.msra.mxu0 0.0
        %334 = vmatprep.subr.mxu0 0.0
        %335 = vmatpush1.msra.mxu0 0.0
        %336 = vmatprep.subr.mxu0 0.0
        %337 = vmatpush1.msra.mxu0 0.0
        %338 = vmatprep.mubr.f32.mxu0 0.0
        %339 = vmatmul.mubr.f32.gmra.mrb[0].mxu0 %v256
        %v340 = vpop.f32.mrb[0].mxu0
        %v341 = vadd.f32 %v273, %v340
        %v342 = vpop.f32.mrb[0].mxu0
        %343 = vdwg.mxu0
        %v344 = vmul.f32 %v341, 0.5
        %v345 = vmul.f32 %v341, 0.044715
        %v346 = vmul.f32 %v345, %v341
        %v347 = vmul.f32 %v346, %v341
        %v348 = vadd.f32 %v341, %v347
        %v349 = vmul.f32 %v348, 0.7978846
        %v350 = vtanh.pop %v349
        %v351 = vadd.f32 %v350, 1.0
        %v352 = vmul.f32 %v344, %v351
        %v353 = vld [vmem:[%s3] sm:$0xff]
        %v354 = vld [vmem:[%s3 + $0x8] sm:$0xff]
        %v355 = vld [vmem:[%s3 + $0x10] sm:$0xff]
        %v356 = vld [vmem:[%s3 + $0x18] sm:$0xff]
        %v357 = vld [vmem:[%s3 + $0x20] sm:$0xff]
        %v358 = vld [vmem:[%s3 + $0x28] sm:$0xff]
        %v359 = vld [vmem:[%s3 + $0x30] sm:$0xff]
        %v360 = vld [vmem:[%s3 + $0x38] sm:$0xff]
        %v361 = vld [vmem:[%s3 + $0x40] sm:$0xff]
        %v362 = vld [vmem:[%s3 + $0x48] sm:$0xff]
        %v363 = vld [vmem:[%s3 + $0x50] sm:$0xff]
        %v364 = vld [vmem:[%s3 + $0x58] sm:$0xff]
        %v365 = vld [vmem:[%s3 + $0x60] sm:$0xff]
        %v366 = vld [vmem:[%s3 + $0x68] sm:$0xff]
        %v367 = vld [vmem:[%s3 + $0x70] sm:$0xff]
        %v368 = vld [vmem:[%s3 + $0x78] sm:$0xff]
        %v369 = vld [vmem:[%s4] sm:$0x1]
        %370 = vmatprep.subr.mxu0 0.0
        %371 = vmatpush1.msra.mxu0 %v353
        %372 = vmatprep.subr.mxu0 0.0
        %373 = vmatpush1.msra.mxu0 %v354
        %374 = vmatprep.subr.mxu0 0.0
        %375 = vmatpush1.msra.mxu0 %v355
        %376 = vmatprep.subr.mxu0 0.0
        %377 = vmatpush1.msra.mxu0 %v356
        %378 = vmatprep.subr.mxu0 0.0
        %379 = vmatpush1.msra.mxu0 %v357
        %380 = vmatprep.subr.mxu0 0.0
        %381 = vmatpush1.msra.mxu0 %v358
        %382 = vmatprep.subr.mxu0 0.0
        %383 = vmatpush1.msra.mxu0 %v359
        %384 = vmatprep.subr.mxu0 0.0
        %385 = vmatpush1.msra.mxu0 %v360
        %386 = vmatprep.subr.mxu0 0.0
        %387 = vmatpush1.msra.mxu0 %v361
        %388 = vmatprep.subr.mxu0 0.0
        %389 = vmatpush1.msra.mxu0 %v362
        %390 = vmatprep.subr.mxu0 0.0
        %391 = vmatpush1.msra.mxu0 %v363
        %392 = vmatprep.subr.mxu0 0.0
        %393 = vmatpush1.msra.mxu0 %v364
        %394 = vmatprep.subr.mxu0 0.0
        %395 = vmatpush1.msra.mxu0 %v365
        %396 = vmatprep.subr.mxu0 0.0
        %397 = vmatpush1.msra.mxu0 %v366
        %398 = vmatprep.subr.mxu0 0.0
        %399 = vmatpush1.msra.mxu0 %v367
        %400 = vmatprep.subr.mxu0 0.0
        %401 = vmatpush1.msra.mxu0 %v368
        %402 = vmatprep.subr.mxu0 0.0
        %403 = vmatpush1.msra.mxu0 0.0
        %404 = vmatprep.subr.mxu0 0.0
        %405 = vmatpush1.msra.mxu0 0.0
        %406 = vmatprep.subr.mxu0 0.0
        %407 = vmatpush1.msra.mxu0 0.0
        %408 = vmatprep.subr.mxu0 0.0
        %409 = vmatpush1.msra.mxu0 0.0
        %410 = vmatprep.subr.mxu0 0.0
        %411 = vmatpush1.msra.mxu0 0.0
        %412 = vmatprep.subr.mxu0 0.0
        %413 = vmatpush1.msra.mxu0 0.0
        %414 = vmatprep.subr.mxu0 0.0
        %415 = vmatpush1.msra.mxu0 0.0
        %416 = vmatprep.subr.mxu0 0.0
        %417 = vmatpush1.msra.mxu0 0.0
        %418 = vmatprep.subr.mxu0 0.0
        %419 = vmatpush1.msra.mxu0 0.0
        %420 = vmatprep.subr.mxu0 0.0
        %421 = vmatpush1.msra.mxu0 0.0
        %422 = vmatprep.subr.mxu0 0.0
        %423 = vmatpush1.msra.mxu0 0.0
        %424 = vmatprep.subr.mxu0 0.0
        %425 = vmatpush1.msra.mxu0 0.0
        %426 = vmatprep.subr.mxu0 0.0
        %427 = vmatpush1.msra.mxu0 0.0
        %428 = vmatprep.subr.mxu0 0.0
        %429 = vmatpush1.msra.mxu0 0.0
        %430 = vmatprep.subr.mxu0 0.0
        %431 = vmatpush1.msra.mxu0 0.0
        %432 = vmatprep.subr.mxu0 0.0
        %433 = vmatpush1.msra.mxu0 0.0
        %434 = vmatprep.mubr.f32.mxu0 0.0
        %435 = vmatmul.mubr.f32.gmra.mrb[0].mxu0 %v352
        %v436 = vpop.f32.mrb[0].mxu0
        %v437 = vadd.f32 %v369, %v436
        %v438 = vpop.f32.mrb[0].mxu0
        %439 = vdwg.mxu0
        %vm440 = vcmask 16384
        %v441 = vsel %vm440, %v437, -inf
        %442 = vmax.xlane.f32.xlu0 %v441
        %v443 = vpop.xlane.xlu0 %442
        %v444 = vsub.f32 %v437, %v443
        %v445 = vmul.f32 %v444, 1.442695
        %v446 = vpow.pop %v445
        %v447 = vsel %vm440, %v446, 0.0
        %448 = vadd.xlane.f32.xlu0 %v447
        %v449 = vpop.xlane.xlu0 %448
        %v450 = vrcp.pop %v449
        %v451 = vmul.f32 %v446, %v450
        %452 = vst.msk [vmem:[%s241] sm:$0x1] %vm440, %v451
        %s453 = sand.u32 %s140, 1
        %s454 = scalar_lea.sflag [#allocation4], %s453
        %s455 = sand.u32 %s140, 1
        %s456 = scalar_lea.vmem [#allocation5], %s455
        // Predicated region
        $region45: #{tpu_custom_call.1} parent=39 // pred_check
          %p457 = pneg %p150
        $region46: #{tpu_custom_call.1} parent=39 // pred_check_branch
          %459 = sbr.rel (%p457) target = $region48
        $region47: #{tpu_custom_call.1} parent=39 // pred_region
          %s461 = ssub.s32 16, 16
          %462 = vsyncadd %s454, %s461
          %s463 = smul.addr %s22, 16
          %s464 = scalar_lea.hbm %s5, %s463
          %s466 = sshll.u32 %s456, 4
          %s467 = int_to_ptr.vmem [resolvable:$true] %s466
          %469 = dma.vmem_to_hbm [thread:$0]  %s467, 16, %s464, %s454
        $region48: #{tpu_custom_call.1} parent=39 // pred_fallthru
          _
      $region40: #{tpu_custom_call.1} parent=5 // pred_fallthru
        _
      %p470 = scmp.le.s32.totalorder 2, %s17
      // Predicated region
      $region49: #{tpu_custom_call.1} parent=5 // pred_check
        %p471 = pneg %p470
      $region50: #{tpu_custom_call.1} parent=5 // pred_check_branch
        %473 = sbr.rel (%p471) target = $region52
      $region51: #{tpu_custom_call.1} parent=5 // pred_region
        %s474 = ssub.s32 %s17, 2
        // Predicated region
        $region53: #{tpu_custom_call.1} parent=51 // pred_check
          %p475 = pneg %p156
        $region54: #{tpu_custom_call.1} parent=51 // pred_check_branch
          %477 = sbr.rel (%p475) target = $region56
        $region55: #{tpu_custom_call.1} parent=51 // pred_region
          %s478 = sand.u32 %s141, 1
          %s479 = scalar_lea.sflag [#allocation4], %s478
          %s480 = sand.u32 %s141, 1
          %s481 = scalar_lea.vmem [#allocation5], %s480
          %482 = dma.done %s479, 16
        $region56: #{tpu_custom_call.1} parent=51 // pred_fallthru
          _
      $region52: #{tpu_custom_call.1} parent=5 // pred_fallthru
        _
    $region6: #{tpu_custom_call.1} parent=1 // loop_footer
      %s21 = sadd.s32 1, %s17
    $region7: #{tpu_custom_call.1} parent=1 // loop_footer_branch
      %16 = sbr.rel target = $region3
    $region8: #{tpu_custom_call.1} parent=1 // loop_exit
      _
    %483 = vsyncpa [#allocation3], 1
    %s484 = scalar_lea.sflag [#allocation3], 1
    %485 = vsyncpa %s484, 1
    %486 = vsyncpa [#allocation4], 1
    %s487 = scalar_lea.sflag [#allocation4], 1
    %488 = vsyncpa %s487, 1

</llo_original>
